<compile_context>
chip_gen: v7x
topology: tpu7x:2x2x1
jax: 0.10.0
libtpu: 0.0.40
codegen_flags: <defaults>
</compile_context>

<pallas_src>
import functools
import math

import jax
import jax.numpy as jnp
from jax.experimental import pallas as pl
from jax.experimental.pallas import tpu as pltpu


def _rand_multilinear_kernel(f_ref, g_ref, rf_ref, rg_ref, o_ref, *, inv_sqrt_d):
    # f_ref : (tile_b, features_dim)   full contraction dim resident in VMEM
    # g_ref : (tile_b, num_classes)
    # rf_ref: (features_dim, tile_n)
    # rg_ref: (num_classes, tile_n)
    # o_ref : (tile_b, tile_n) float32
    rf = rf_ref[...]
    rg = rg_ref[...]
    # Cast the (tiny) activation tiles to the random-matrix dtype in VMEM so a
    # bf16-stored Rf/Rg hits the native MXU path; accumulation stays float32.
    ff = jnp.dot(f_ref[...].astype(rf.dtype), rf, preferred_element_type=jnp.float32)
    gg = jnp.dot(g_ref[...].astype(rg.dtype), rg, preferred_element_type=jnp.float32)
    o_ref[...] = (ff * gg * inv_sqrt_d).astype(o_ref.dtype)


def _hw_info():
    """(vmem_capacity_bytes, tensorcores_per_chip) with conservative fallbacks."""
    vmem_bytes = 64 * 1024 * 1024  # conservative fallback (v7x per-TC VMEM)
    try:
        info = pltpu.get_tpu_info()
        vmem_bytes = int(getattr(info, "vmem_capacity_bytes", vmem_bytes))
    except Exception:
        pass
    n_cores = 1
    try:
        kind = jax.devices()[0].device_kind.lower()
        if "v7" in kind or "7x" in kind:
            n_cores = 2
    except Exception:
        pass
    return vmem_bytes, n_cores


def _largest_div_tile(dim, unit, cap):
    """Largest multiple of `unit` that divides `dim` and is <= min(cap, dim)."""
    best = None
    d = unit
    hi = min(cap, dim)
    while d <= hi:
        if dim % d == 0:
            best = d
        d += unit
    return best


def randomized_multilinear_map(f, g, Rf, Rg):
    """out = ((f @ Rf) * (g @ Rg)) / sqrt(output_dim), float32.

    Rf / Rg may be pre-stored in bf16 (they are fixed random buffers sampled
    once at module init); that halves the dominant HBM streams while the dots
    still accumulate in float32 and the output stays float32.
    """
    B, features_dim = f.shape
    B_g, num_classes = g.shape
    output_dim = Rf.shape[1]
    assert B_g == B
    assert Rf.shape == (features_dim, output_dim)
    assert Rg.shape == (num_classes, output_dim)

    fg_bytes = jnp.dtype(f.dtype).itemsize
    r_bytes = jnp.dtype(Rf.dtype).itemsize
    out_bytes = 4  # float32 output

    vmem_capacity, n_cores = _hw_info()
    vmem_budget = int(vmem_capacity * 0.55)

    # ---- Batch tiling: small batches fully resident; tile large ones. ----
    if B <= 256:
        tile_b = B
    else:
        tile_b = _largest_div_tile(B, 8, 256) or B

    def _resident(tb):
        # double-buffered f/g blocks
        return 2 * tb * (features_dim + num_classes) * fg_bytes

    # Guard: shrink tile_b if the activation blocks alone blow the budget.
    while (_resident(tile_b) > vmem_budget // 2
           and tile_b >= 16 and tile_b % 16 == 0 and B % (tile_b // 2) == 0):
        tile_b //= 2
    resident = _resident(tile_b)

    # ---- Output-dim tiling (main lever: wide, lane-dense tiles). ----
    per_col = 2 * (features_dim + num_classes) * r_bytes + 2 * tile_b * out_bytes
    cap_cols = (vmem_budget - resident) // per_col
    cap_cols = max(128, min(2048, cap_cols))

    if output_dim % 128 == 0:
        tile_n = _largest_div_tile(output_dim, 128, cap_cols) or output_dim
        # 2-TC chip (v7x): split the output dim in two only when each half-tile
        # of Rf/Rg is big enough (>= 1 MiB) to amortize the grid-step overhead.
        half_bytes = (features_dim + num_classes) * (output_dim // 2) * r_bytes
        if (n_cores >= 2 and output_dim // tile_n < 2
                and output_dim % 256 == 0 and half_bytes >= (1 << 20)):
            tile_n = output_dim // 2
    else:
        # TODO(synk): ragged output_dim keeps a single full-width block (masked
        # lane-edge stores); no 128-multiple tiling possible without padding.
        tile_n = output_dim

    num_n_blocks = output_dim // tile_n
    num_b_blocks = B // tile_b

    # Double-buffered footprint (already x2) + headroom, capped well under VMEM.
    need = (2 * tile_b * (features_dim + num_classes) * fg_bytes
            + 2 * (features_dim + num_classes) * tile_n * r_bytes
            + 2 * tile_b * tile_n * out_bytes)
    vmem_limit = int(min(need + 8 * 1024 * 1024, int(vmem_capacity * 0.75)))
    vmem_limit = max(vmem_limit, 16 * 1024 * 1024)

    inv_sqrt_d = 1.0 / math.sqrt(float(output_dim))
    kernel = functools.partial(_rand_multilinear_kernel, inv_sqrt_d=inv_sqrt_d)

    # Actual streamed bytes under the chosen grid order: Rf/Rg exactly once,
    # f/g once per output-dim block, output once.
    cost = pl.CostEstimate(
        flops=2 * B * output_dim * (features_dim + num_classes),
        transcendentals=0,
        bytes_accessed=(
            r_bytes * (features_dim + num_classes) * output_dim
            + fg_bytes * num_n_blocks * B * (features_dim + num_classes)
            + out_bytes * B * output_dim),
    )

    # Grid: output-dim OUTER, batch INNER -> Rf/Rg (dominant HBM streams) are
    # fetched exactly once; only the tiny f/g blocks are re-fetched.
    return pl.pallas_call(
        kernel,
        out_shape=jax.ShapeDtypeStruct((B, output_dim), jnp.float32),
        grid_spec=pltpu.PrefetchScalarGridSpec(
            num_scalar_prefetch=0,
            grid=(num_n_blocks, num_b_blocks),
            in_specs=[
                # f / g: per-batch-block (inner axis), constant along output dim.
                pl.BlockSpec((tile_b, features_dim), lambda j, i: (i, 0)),
                pl.BlockSpec((tile_b, num_classes), lambda j, i: (i, 0)),
                # Rf / Rg: tiled along the output dimension (outer axis).
                pl.BlockSpec((features_dim, tile_n), lambda j, i: (0, j)),
                pl.BlockSpec((num_classes, tile_n), lambda j, i: (0, j)),
            ],
            out_specs=pl.BlockSpec((tile_b, tile_n), lambda j, i: (i, j)),
        ),
        compiler_params=pltpu.CompilerParams(
            # Outer (output-dim) axis is the megacore-sharded one on 2-TC chips:
            # each core then reads a disjoint half of Rf/Rg.
            dimension_semantics=("parallel", "arbitrary"),
            vmem_limit_bytes=vmem_limit,
        ),
        cost_estimate=cost,
    )(f, g, Rf, Rg)


if __name__ == "__main__":
    # Small shapes consistent with the module's forward (output_dim = default).
    batch = 8
    features_dim = 32
    num_classes = 16
    output_dim = 1024

    key = jax.random.PRNGKey(0)
    kf, kg, krf, krg = jax.random.split(key, 4)

    f = jax.random.normal(kf, (batch, features_dim), dtype=jnp.float32)
    g = jax.random.normal(kg, (batch, num_classes), dtype=jnp.float32)
    # Deterministic stand-ins for torch.randn(features_dim, output_dim) etc.
    Rf = jax.random.normal(krf, (features_dim, output_dim), dtype=jnp.float32)
    Rg = jax.random.normal(krg, (num_classes, output_dim), dtype=jnp.float32)

    # Reference in plain JAX.
    ref = (f @ Rf) * (g @ Rg) / math.sqrt(float(output_dim))

    # Exact (float32) path.
    out = jax.block_until_ready(randomized_multilinear_map(f, g, Rf, Rg))
    assert out.shape == (batch, output_dim)
    assert jnp.allclose(out, ref, atol=1e-4, rtol=1e-4), "f32 mismatch vs reference"

    # bf16-stored Rf/Rg (the fixed random buffers): halves the dominant HBM
    # streams; f/g stay f32 at the boundary and are cast in-kernel.
    out_bf16 = jax.block_until_ready(
        randomized_multilinear_map(f, g, Rf.astype(jnp.bfloat16),
                                   Rg.astype(jnp.bfloat16)))
    assert out_bf16.shape == (batch, output_dim)
    assert jnp.allclose(out_bf16, ref, atol=1e-1, rtol=5e-2), "bf16 path too far off"

    # Batch-tiled path (B > 256) exercising the reordered grid
    # (output-dim outer, batch inner): Rf/Rg streamed once, f/g re-fetched.
    B2, D2 = 512, 256
    f2 = jax.random.normal(kf, (B2, features_dim), dtype=jnp.float32)
    g2 = jax.random.normal(kg, (B2, num_classes), dtype=jnp.float32)
    Rf2 = jax.random.normal(krf, (features_dim, D2), dtype=jnp.float32)
    Rg2 = jax.random.normal(krg, (num_classes, D2), dtype=jnp.float32)
    ref2 = (f2 @ Rf2) * (g2 @ Rg2) / math.sqrt(float(D2))
    out2 = jax.block_until_ready(randomized_multilinear_map(f2, g2, Rf2, Rg2))
    assert out2.shape == (B2, D2)
    assert jnp.allclose(out2, ref2, atol=1e-4, rtol=1e-4), "batch-tiled mismatch"

    print("KERNEL_OK")
</pallas_src>

<mosaic_0001>
module attributes {stable_mosaic.version = 11 : i64} {
  func.func @_rand_multilinear_kernel(%arg0: i32, %arg1: i32, %arg2: memref<8x32xf32, #tpu.memory_space<vmem>>, %arg3: memref<8x16xf32, #tpu.memory_space<vmem>>, %arg4: memref<32x1024xf32, #tpu.memory_space<vmem>>, %arg5: memref<16x1024xf32, #tpu.memory_space<vmem>>, %arg6: memref<8x1024xf32, #tpu.memory_space<vmem>>) attributes {dimension_semantics = [#tpu.dimension_semantics<parallel>, #tpu.dimension_semantics<arbitrary>], iteration_bounds = array<i64: 1, 1>, scalar_prefetch = 0 : i64, scratch_operands = 0 : i64, tpu.core_type = #tpu.core_type<tc>, window_params = [{transform_indices = @transform_0, window_bounds = array<i64: 8, 32>}, {transform_indices = @transform_1, window_bounds = array<i64: 8, 16>}, {transform_indices = @transform_2, window_bounds = array<i64: 32, 1024>}, {transform_indices = @transform_3, window_bounds = array<i64: 16, 1024>}, {transform_indices = @transform_4, window_bounds = array<i64: 8, 1024>}]} {
    %c0 = arith.constant 0 : index
    %c0_0 = arith.constant 0 : index
    %0 = vector.load %arg4[%c0, %c0_0] : memref<32x1024xf32, #tpu.memory_space<vmem>>, vector<32x1024xf32>
    %c0_1 = arith.constant 0 : index
    %c0_2 = arith.constant 0 : index
    %1 = vector.load %arg5[%c0_1, %c0_2] : memref<16x1024xf32, #tpu.memory_space<vmem>>, vector<16x1024xf32>
    %c0_3 = arith.constant 0 : index
    %c0_4 = arith.constant 0 : index
    %2 = vector.load %arg2[%c0_3, %c0_4] : memref<8x32xf32, #tpu.memory_space<vmem>>, vector<8x32xf32>
    %cst = arith.constant dense<0.000000e+00> : vector<8x1024xf32>
    %3 = tpu.matmul %2, %0, %cst {dimension_numbers = #tpu.dot_dimension_numbers<[1], [0], [0], [1], [0, 0, 1, 1], [], []>} : vector<8x32xf32>, vector<32x1024xf32>, vector<8x1024xf32> -> vector<8x1024xf32>
    %c0_5 = arith.constant 0 : index
    %c0_6 = arith.constant 0 : index
    %4 = vector.load %arg3[%c0_5, %c0_6] : memref<8x16xf32, #tpu.memory_space<vmem>>, vector<8x16xf32>
    %cst_7 = arith.constant dense<0.000000e+00> : vector<8x1024xf32>
    %5 = tpu.matmul %4, %1, %cst_7 {dimension_numbers = #tpu.dot_dimension_numbers<[1], [0], [0], [1], [0, 0, 1, 1], [], []>} : vector<8x16xf32>, vector<16x1024xf32>, vector<8x1024xf32> -> vector<8x1024xf32>
    %6 = arith.mulf %3, %5 : vector<8x1024xf32>
    %cst_8 = arith.constant 3.125000e-02 : f32
    %7 = vector.broadcast %cst_8 : f32 to vector<8x1024xf32>
    %8 = arith.mulf %6, %7 : vector<8x1024xf32>
    %c0_9 = arith.constant 0 : index
    %c0_10 = arith.constant 0 : index
    %9 = vector.load %arg6[%c0_9, %c0_10] : memref<8x1024xf32, #tpu.memory_space<vmem>>, vector<8x1024xf32>
    tpu.vector_store %arg6[%c0_9, %c0_10], %8 {strides = array<i32>} : memref<8x1024xf32, #tpu.memory_space<vmem>>, vector<8x1024xf32>,
    return
  }
  func.func @transform_0(%arg0: i32, %arg1: i32) -> (i32, i32) {
    %c0_i32 = arith.constant 0 : i32
    %c0_i32_0 = arith.constant 0 : i32
    return %arg1, %c0_i32 : i32, i32
  }
  func.func @transform_1(%arg0: i32, %arg1: i32) -> (i32, i32) {
    %c0_i32 = arith.constant 0 : i32
    %c0_i32_0 = arith.constant 0 : i32
    return %arg1, %c0_i32 : i32, i32
  }
  func.func @transform_2(%arg0: i32, %arg1: i32) -> (i32, i32) {
    %c0_i32 = arith.constant 0 : i32
    %c0_i32_0 = arith.constant 0 : i32
    return %c0_i32, %arg0 : i32, i32
  }
  func.func @transform_3(%arg0: i32, %arg1: i32) -> (i32, i32) {
    %c0_i32 = arith.constant 0 : i32
    %c0_i32_0 = arith.constant 0 : i32
    return %c0_i32, %arg0 : i32, i32
  }
  func.func @transform_4(%arg0: i32, %arg1: i32) -> (i32, i32) {
    %c0_i32 = arith.constant 0 : i32
    return %arg1, %arg0 : i32, i32
  }
}

</mosaic_0001>

<llo_original>
// kernel: tpu_custom_call.1
$region0: #{tpu_custom_call.1}
  #allocation0 [shape = 'u32[]', space=smem, size = 0x4, offset = 0x4, fixed_abs, tag = 'smem constant byte address 0x4 - core index']
  #allocation1 [shape = 'u32[144,128]{1,0:T(1,128)}', space=vmem, size = 0x12000, scoped, tag = 'internal scratch']
  %s0 = inlined_call_operand.hbm [shape: f32[8,32], index: 0, kind: input, shape index: {}]
  %s1 = inlined_call_operand.hbm [shape: f32[8,16], index: 1, kind: input, shape index: {}]
  %s2 = inlined_call_operand.hbm [shape: f32[32,1024], index: 2, kind: input, shape index: {}]
  %s3 = inlined_call_operand.hbm [shape: f32[16,1024], index: 3, kind: input, shape index: {}]
  %s4 = inlined_call_operand.hbm [shape: f32[8,1024], index: 4, kind: output, shape index: {}]
  %s5 = sld [smem:[#allocation0]]
  $region42: #{tpu_custom_call.1} parent=0
    _
  %s7 = ssub.s32 1, %s5
  %s8 = scalar_select 0, %s7, %s5
  $region1: #{tpu_custom_call.1} parent=0
    #allocation2 [shape = 'u8[4096]{0}', space=vmem, size = 0x1000, scoped, tag = 'input window, operand 0, single buffered']
    #allocation3 [shape = 's32[1]{0}', space=sflag, size = 0x4, scoped, tag = 'scoped memory for tpu_custom_call.1']
    #allocation4 [shape = 's32[1]{0}', space=sflag, size = 0x4, scoped, tag = 'scoped memory for tpu_custom_call.1']
    #allocation5 [shape = 'u8[4096]{0}', space=vmem, size = 0x1000, scoped, tag = 'input window, operand 1, single buffered']
    #allocation6 [shape = 's32[1]{0}', space=sflag, size = 0x4, scoped, tag = 'scoped memory for tpu_custom_call.1']
    #allocation7 [shape = 'u8[131072]{0}', space=vmem, size = 0x20000, scoped, tag = 'input window, operand 2, single buffered']
    #allocation8 [shape = 'u8[65536]{0}', space=vmem, size = 0x10000, scoped, tag = 'input window, operand 3, single buffered']
    #allocation9 [shape = 's32[1]{0}', space=sflag, size = 0x4, scoped, tag = 'scoped memory for tpu_custom_call.1']
    #allocation10 [shape = 'u8[32768]{0}', space=vmem, size = 0x8000, scoped, tag = 'output window, operand 0, single buffered']
    %9 = vsyncpa [#allocation3], 0
    %10 = vsyncpa [#allocation6], 0
    %11 = vsyncpa [#allocation9], 0
    %12 = vsyncpa [#allocation4], 0
    // Predicated region
    $region2: #{tpu_custom_call.1} parent=1 // pred_check
      _
    $region3: #{tpu_custom_call.1} parent=1 // pred_check_branch
      %14 = sbr.rel (0) target = $region5
    $region4: #{tpu_custom_call.1} parent=1 // pred_region
      %s16 = ssub.s32 128, 128
      %17 = vsyncadd [#allocation3], %s16
      %s19 = sshll.u32 [#allocation2], 4
      %s20 = int_to_ptr.vmem [resolvable:$true] %s19
      %22 = dma.hbm_to_vmem [thread:$0]  %s0, 128, %s20, [#allocation3]
    $region5: #{tpu_custom_call.1} parent=1 // pred_fallthru
      _
    // Predicated region
    $region6: #{tpu_custom_call.1} parent=1 // pred_check
      _
    $region7: #{tpu_custom_call.1} parent=1 // pred_check_branch
      %24 = sbr.rel (0) target = $region9
    $region8: #{tpu_custom_call.1} parent=1 // pred_region
      %s26 = ssub.s32 128, 128
      %27 = vsyncadd [#allocation6], %s26
      %s29 = sshll.u32 [#allocation5], 4
      %s30 = int_to_ptr.vmem [resolvable:$true] %s29
      %32 = dma.hbm_to_vmem [thread:$0]  %s1, 128, %s30, [#allocation6]
    $region9: #{tpu_custom_call.1} parent=1 // pred_fallthru
      _
    // Predicated region
    $region10: #{tpu_custom_call.1} parent=1 // pred_check
      _
    $region11: #{tpu_custom_call.1} parent=1 // pred_check_branch
      %34 = sbr.rel (0) target = $region13
    $region12: #{tpu_custom_call.1} parent=1 // pred_region
      %s36 = ssub.s32 4096, 4096
      %37 = vsyncadd [#allocation6], %s36
      %s38 = sshll.u32 [#allocation7], 4
      %s39 = int_to_ptr.vmem [resolvable:$true] %s38
      %44 = dma.hbm_to_vmem [thread:$0]  %s2, 4096, %s39, [#allocation6], 1024, 1024, 64
    $region13: #{tpu_custom_call.1} parent=1 // pred_fallthru
      _
    // Predicated region
    $region14: #{tpu_custom_call.1} parent=1 // pred_check
      _
    $region15: #{tpu_custom_call.1} parent=1 // pred_check_branch
      %46 = sbr.rel (0) target = $region17
    $region16: #{tpu_custom_call.1} parent=1 // pred_region
      %s48 = ssub.s32 2048, 2048
      %49 = vsyncadd [#allocation9], %s48
      %s50 = sshll.u32 [#allocation8], 4
      %s51 = int_to_ptr.vmem [resolvable:$true] %s50
      %56 = dma.hbm_to_vmem [thread:$0]  %s3, 2048, %s51, [#allocation9], 1024, 1024, 64
    $region17: #{tpu_custom_call.1} parent=1 // pred_fallthru
      _
    // Predicated region
    $region18: #{tpu_custom_call.1} parent=1 // pred_check
      _
    $region19: #{tpu_custom_call.1} parent=1 // pred_check_branch
      %58 = sbr.rel (0) target = $region21
    $region20: #{tpu_custom_call.1} parent=1 // pred_region
      %59 = dma.done [#allocation3], 128
    $region21: #{tpu_custom_call.1} parent=1 // pred_fallthru
      _
    // Predicated region
    $region22: #{tpu_custom_call.1} parent=1 // pred_check
      _
    $region23: #{tpu_custom_call.1} parent=1 // pred_check_branch
      %61 = sbr.rel (0) target = $region25
    $region24: #{tpu_custom_call.1} parent=1 // pred_region
      %62 = dma.done [#allocation6], 128
    $region25: #{tpu_custom_call.1} parent=1 // pred_fallthru
      _
    // Predicated region
    $region26: #{tpu_custom_call.1} parent=1 // pred_check
      _
    $region27: #{tpu_custom_call.1} parent=1 // pred_check_branch
      %64 = sbr.rel (0) target = $region29
    $region28: #{tpu_custom_call.1} parent=1 // pred_region
      %65 = dma.done [#allocation6], 4096
    $region29: #{tpu_custom_call.1} parent=1 // pred_fallthru
      _
    // Predicated region
    $region30: #{tpu_custom_call.1} parent=1 // pred_check
      _
    $region31: #{tpu_custom_call.1} parent=1 // pred_check_branch
      %67 = sbr.rel (0) target = $region33
    $region32: #{tpu_custom_call.1} parent=1 // pred_region
      %68 = dma.done [#allocation9], 2048
    $region33: #{tpu_custom_call.1} parent=1 // pred_fallthru
      _
    %v69 = vld [vmem:[#allocation7] sm:$0xff]
    %v70 = vld [vmem:[#allocation7 + $0x8] sm:$0xff]
    %v71 = vld [vmem:[#allocation7 + $0x10] sm:$0xff]
    %v72 = vld [vmem:[#allocation7 + $0x18] sm:$0xff]
    %v73 = vld [vmem:[#allocation7 + $0x20] sm:$0xff]
    %v74 = vld [vmem:[#allocation7 + $0x28] sm:$0xff]
    %v75 = vld [vmem:[#allocation7 + $0x30] sm:$0xff]
    %v76 = vld [vmem:[#allocation7 + $0x38] sm:$0xff]
    %v77 = vld [vmem:[#allocation7 + $0x40] sm:$0xff]
    %v78 = vld [vmem:[#allocation7 + $0x48] sm:$0xff]
    %v79 = vld [vmem:[#allocation7 + $0x50] sm:$0xff]
    %v80 = vld [vmem:[#allocation7 + $0x58] sm:$0xff]
    %v81 = vld [vmem:[#allocation7 + $0x60] sm:$0xff]
    %v82 = vld [vmem:[#allocation7 + $0x68] sm:$0xff]
    %v83 = vld [vmem:[#allocation7 + $0x70] sm:$0xff]
    %v84 = vld [vmem:[#allocation7 + $0x78] sm:$0xff]
    %v85 = vld [vmem:[#allocation7 + $0x80] sm:$0xff]
    %v86 = vld [vmem:[#allocation7 + $0x88] sm:$0xff]
    %v87 = vld [vmem:[#allocation7 + $0x90] sm:$0xff]
    %v88 = vld [vmem:[#allocation7 + $0x98] sm:$0xff]
    %v89 = vld [vmem:[#allocation7 + $0xa0] sm:$0xff]
    %v90 = vld [vmem:[#allocation7 + $0xa8] sm:$0xff]
    %v91 = vld [vmem:[#allocation7 + $0xb0] sm:$0xff]
    %v92 = vld [vmem:[#allocation7 + $0xb8] sm:$0xff]
    %v93 = vld [vmem:[#allocation7 + $0xc0] sm:$0xff]
    %v94 = vld [vmem:[#allocation7 + $0xc8] sm:$0xff]
    %v95 = vld [vmem:[#allocation7 + $0xd0] sm:$0xff]
    %v96 = vld [vmem:[#allocation7 + $0xd8] sm:$0xff]
    %v97 = vld [vmem:[#allocation7 + $0xe0] sm:$0xff]
    %v98 = vld [vmem:[#allocation7 + $0xe8] sm:$0xff]
    %v99 = vld [vmem:[#allocation7 + $0xf0] sm:$0xff]
    %v100 = vld [vmem:[#allocation7 + $0xf8] sm:$0xff]
    %v101 = vld [vmem:[#allocation8] sm:$0xff]
    %v102 = vld [vmem:[#allocation8 + $0x8] sm:$0xff]
    %v103 = vld [vmem:[#allocation8 + $0x10] sm:$0xff]
    %v104 = vld [vmem:[#allocation8 + $0x18] sm:$0xff]
    %v105 = vld [vmem:[#allocation8 + $0x20] sm:$0xff]
    %v106 = vld [vmem:[#allocation8 + $0x28] sm:$0xff]
    %v107 = vld [vmem:[#allocation8 + $0x30] sm:$0xff]
    %v108 = vld [vmem:[#allocation8 + $0x38] sm:$0xff]
    %v109 = vld [vmem:[#allocation8 + $0x40] sm:$0xff]
    %v110 = vld [vmem:[#allocation8 + $0x48] sm:$0xff]
    %v111 = vld [vmem:[#allocation8 + $0x50] sm:$0xff]
    %v112 = vld [vmem:[#allocation8 + $0x58] sm:$0xff]
    %v113 = vld [vmem:[#allocation8 + $0x60] sm:$0xff]
    %v114 = vld [vmem:[#allocation8 + $0x68] sm:$0xff]
    %v115 = vld [vmem:[#allocation8 + $0x70] sm:$0xff]
    %v116 = vld [vmem:[#allocation8 + $0x78] sm:$0xff]
    %v117 = vld [vmem:[#allocation2] sm:$0xff]
    %vm118 = vcmask 261120
    %v120 = vsel %vm118, %v117, 0
    %122 = vmatprep.subr.mxu0 %v70
    %123 = vmatpush1.msra.mxu0 %v69
    %124 = vmatprep.subr.mxu0 %v78
    %125 = vmatpush1.msra.mxu0 %v77
    %126 = vmatprep.subr.mxu0 %v86
    %127 = vmatpush1.msra.mxu0 %v85
    %128 = vmatprep.subr.mxu0 %v94
    %129 = vmatpush1.msra.mxu0 %v93
    %130 = vmatprep.subr.mxu0 0.0
    %131 = vmatpush1.msra.mxu0 0.0
    %132 = vmatprep.subr.mxu0 0.0
    %133 = vmatpush1.msra.mxu0 0.0
    %134 = vmatprep.subr.mxu0 0.0
    %135 = vmatpush1.msra.mxu0 0.0
    %136 = vmatprep.subr.mxu0 0.0
    %137 = vmatpush1.msra.mxu0 0.0
    %138 = vmatprep.subr.mxu0 0.0
    %139 = vmatpush1.msra.mxu0 0.0
    %140 = vmatprep.subr.mxu0 0.0
    %141 = vmatpush1.msra.mxu0 0.0
    %142 = vmatprep.subr.mxu0 0.0
    %143 = vmatpush1.msra.mxu0 0.0
    %144 = vmatprep.subr.mxu0 0.0
    %145 = vmatpush1.msra.mxu0 0.0
    %146 = vmatprep.subr.mxu0 0.0
    %147 = vmatpush1.msra.mxu0 0.0
    %148 = vmatprep.subr.mxu0 0.0
    %149 = vmatpush1.msra.mxu0 0.0
    %150 = vmatprep.subr.mxu0 0.0
    %151 = vmatpush1.msra.mxu0 0.0
    %152 = vmatprep.subr.mxu0 0.0
    %153 = vmatpush1.msra.mxu0 0.0
    %154 = vmatprep.subr.mxu0 0.0
    %155 = vmatpush1.msra.mxu0 0.0
    %156 = vmatprep.subr.mxu0 0.0
    %157 = vmatpush1.msra.mxu0 0.0
    %158 = vmatprep.subr.mxu0 0.0
    %159 = vmatpush1.msra.mxu0 0.0
    %160 = vmatprep.subr.mxu0 0.0
    %161 = vmatpush1.msra.mxu0 0.0
    %162 = vmatprep.subr.mxu0 0.0
    %163 = vmatpush1.msra.mxu0 0.0
    %164 = vmatprep.subr.mxu0 0.0
    %165 = vmatpush1.msra.mxu0 0.0
    %166 = vmatprep.subr.mxu0 0.0
    %167 = vmatpush1.msra.mxu0 0.0
    %168 = vmatprep.subr.mxu0 0.0
    %169 = vmatpush1.msra.mxu0 0.0
    %170 = vmatprep.subr.mxu0 0.0
    %171 = vmatpush1.msra.mxu0 0.0
    %172 = vmatprep.subr.mxu0 0.0
    %173 = vmatpush1.msra.mxu0 0.0
    %174 = vmatprep.subr.mxu0 0.0
    %175 = vmatpush1.msra.mxu0 0.0
    %176 = vmatprep.subr.mxu0 0.0
    %177 = vmatpush1.msra.mxu0 0.0
    %178 = vmatprep.subr.mxu0 0.0
    %179 = vmatpush1.msra.mxu0 0.0
    %180 = vmatprep.subr.mxu0 0.0
    %181 = vmatpush1.msra.mxu0 0.0
    %182 = vmatprep.subr.mxu0 0.0
    %183 = vmatpush1.msra.mxu0 0.0
    %184 = vmatprep.subr.mxu0 0.0
    %185 = vmatpush1.msra.mxu0 0.0
    %186 = vmatprep.mubr.f32.mxu0 0.0
    %187 = vmatmul.mubr.f32.gmra.mrb[0].mxu0 %v120
    %v188 = vpop.f32.mrb[0].mxu0
    %v189 = vadd.f32 0.0, %v188
    %v190 = vpop.f32.mrb[0].mxu0
    %v191 = vadd.f32 0.0, %v190
    %192 = vdwg.mxu0
    %193 = vmatprep.subr.mxu0 %v72
    %194 = vmatpush1.msra.mxu0 %v71
    %195 = vmatprep.subr.mxu0 %v80
    %196 = vmatpush1.msra.mxu0 %v79
    %197 = vmatprep.subr.mxu0 %v88
    %198 = vmatpush1.msra.mxu0 %v87
    %199 = vmatprep.subr.mxu0 %v96
    %200 = vmatpush1.msra.mxu0 %v95
    %201 = vmatprep.subr.mxu0 0.0
    %202 = vmatpush1.msra.mxu0 0.0
    %203 = vmatprep.subr.mxu0 0.0
    %204 = vmatpush1.msra.mxu0 0.0
    %205 = vmatprep.subr.mxu0 0.0
    %206 = vmatpush1.msra.mxu0 0.0
    %207 = vmatprep.subr.mxu0 0.0
    %208 = vmatpush1.msra.mxu0 0.0
    %209 = vmatprep.subr.mxu0 0.0
    %210 = vmatpush1.msra.mxu0 0.0
    %211 = vmatprep.subr.mxu0 0.0
    %212 = vmatpush1.msra.mxu0 0.0
    %213 = vmatprep.subr.mxu0 0.0
    %214 = vmatpush1.msra.mxu0 0.0
    %215 = vmatprep.subr.mxu0 0.0
    %216 = vmatpush1.msra.mxu0 0.0
    %217 = vmatprep.subr.mxu0 0.0
    %218 = vmatpush1.msra.mxu0 0.0
    %219 = vmatprep.subr.mxu0 0.0
    %220 = vmatpush1.msra.mxu0 0.0
    %221 = vmatprep.subr.mxu0 0.0
    %222 = vmatpush1.msra.mxu0 0.0
    %223 = vmatprep.subr.mxu0 0.0
    %224 = vmatpush1.msra.mxu0 0.0
    %225 = vmatprep.subr.mxu0 0.0
    %226 = vmatpush1.msra.mxu0 0.0
    %227 = vmatprep.subr.mxu0 0.0
    %228 = vmatpush1.msra.mxu0 0.0
    %229 = vmatprep.subr.mxu0 0.0
    %230 = vmatpush1.msra.mxu0 0.0
    %231 = vmatprep.subr.mxu0 0.0
    %232 = vmatpush1.msra.mxu0 0.0
    %233 = vmatprep.subr.mxu0 0.0
    %234 = vmatpush1.msra.mxu0 0.0
    %235 = vmatprep.subr.mxu0 0.0
    %236 = vmatpush1.msra.mxu0 0.0
    %237 = vmatprep.subr.mxu0 0.0
    %238 = vmatpush1.msra.mxu0 0.0
    %239 = vmatprep.subr.mxu0 0.0
    %240 = vmatpush1.msra.mxu0 0.0
    %241 = vmatprep.subr.mxu0 0.0
    %242 = vmatpush1.msra.mxu0 0.0
    %243 = vmatprep.subr.mxu0 0.0
    %244 = vmatpush1.msra.mxu0 0.0
    %245 = vmatprep.subr.mxu0 0.0
    %246 = vmatpush1.msra.mxu0 0.0
    %247 = vmatprep.subr.mxu0 0.0
    %248 = vmatpush1.msra.mxu0 0.0
    %249 = vmatprep.subr.mxu0 0.0
    %250 = vmatpush1.msra.mxu0 0.0
    %251 = vmatprep.subr.mxu0 0.0
    %252 = vmatpush1.msra.mxu0 0.0
    %253 = vmatprep.subr.mxu0 0.0
    %254 = vmatpush1.msra.mxu0 0.0
    %255 = vmatprep.subr.mxu0 0.0
    %256 = vmatpush1.msra.mxu0 0.0
    %257 = vmatprep.mubr.f32.mxu0 0.0
    %258 = vmatmul.mubr.f32.gmra.mrb[0].mxu0 %v120
    %v259 = vpop.f32.mrb[0].mxu0
    %v260 = vadd.f32 0.0, %v259
    %v261 = vpop.f32.mrb[0].mxu0
    %v262 = vadd.f32 0.0, %v261
    %263 = vdwg.mxu0
    %264 = vmatprep.subr.mxu0 %v74
    %265 = vmatpush1.msra.mxu0 %v73
    %266 = vmatprep.subr.mxu0 %v82
    %267 = vmatpush1.msra.mxu0 %v81
    %268 = vmatprep.subr.mxu0 %v90
    %269 = vmatpush1.msra.mxu0 %v89
    %270 = vmatprep.subr.mxu0 %v98
    %271 = vmatpush1.msra.mxu0 %v97
    %272 = vmatprep.subr.mxu0 0.0
    %273 = vmatpush1.msra.mxu0 0.0
    %274 = vmatprep.subr.mxu0 0.0
    %275 = vmatpush1.msra.mxu0 0.0
    %276 = vmatprep.subr.mxu0 0.0
    %277 = vmatpush1.msra.mxu0 0.0
    %278 = vmatprep.subr.mxu0 0.0
    %279 = vmatpush1.msra.mxu0 0.0
    %280 = vmatprep.subr.mxu0 0.0
    %281 = vmatpush1.msra.mxu0 0.0
    %282 = vmatprep.subr.mxu0 0.0
    %283 = vmatpush1.msra.mxu0 0.0
    %284 = vmatprep.subr.mxu0 0.0
    %285 = vmatpush1.msra.mxu0 0.0
    %286 = vmatprep.subr.mxu0 0.0
    %287 = vmatpush1.msra.mxu0 0.0
    %288 = vmatprep.subr.mxu0 0.0
    %289 = vmatpush1.msra.mxu0 0.0
    %290 = vmatprep.subr.mxu0 0.0
    %291 = vmatpush1.msra.mxu0 0.0
    %292 = vmatprep.subr.mxu0 0.0
    %293 = vmatpush1.msra.mxu0 0.0
    %294 = vmatprep.subr.mxu0 0.0
    %295 = vmatpush1.msra.mxu0 0.0
    %296 = vmatprep.subr.mxu0 0.0
    %297 = vmatpush1.msra.mxu0 0.0
    %298 = vmatprep.subr.mxu0 0.0
    %299 = vmatpush1.msra.mxu0 0.0
    %300 = vmatprep.subr.mxu0 0.0
    %301 = vmatpush1.msra.mxu0 0.0
    %302 = vmatprep.subr.mxu0 0.0
    %303 = vmatpush1.msra.mxu0 0.0
    %304 = vmatprep.subr.mxu0 0.0
    %305 = vmatpush1.msra.mxu0 0.0
    %306 = vmatprep.subr.mxu0 0.0
    %307 = vmatpush1.msra.mxu0 0.0
    %308 = vmatprep.subr.mxu0 0.0
    %309 = vmatpush1.msra.mxu0 0.0
    %310 = vmatprep.subr.mxu0 0.0
    %311 = vmatpush1.msra.mxu0 0.0
    %312 = vmatprep.subr.mxu0 0.0
    %313 = vmatpush1.msra.mxu0 0.0
    %314 = vmatprep.subr.mxu0 0.0
    %315 = vmatpush1.msra.mxu0 0.0
    %316 = vmatprep.subr.mxu0 0.0
    %317 = vmatpush1.msra.mxu0 0.0
    %318 = vmatprep.subr.mxu0 0.0
    %319 = vmatpush1.msra.mxu0 0.0
    %320 = vmatprep.subr.mxu0 0.0
    %321 = vmatpush1.msra.mxu0 0.0
    %322 = vmatprep.subr.mxu0 0.0
    %323 = vmatpush1.msra.mxu0 0.0
    %324 = vmatprep.subr.mxu0 0.0
    %325 = vmatpush1.msra.mxu0 0.0
    %326 = vmatprep.subr.mxu0 0.0
    %327 = vmatpush1.msra.mxu0 0.0
    %328 = vmatprep.mubr.f32.mxu0 0.0
    %329 = vmatmul.mubr.f32.gmra.mrb[0].mxu0 %v120
    %v330 = vpop.f32.mrb[0].mxu0
    %v331 = vadd.f32 0.0, %v330
    %v332 = vpop.f32.mrb[0].mxu0
    %v333 = vadd.f32 0.0, %v332
    %334 = vdwg.mxu0
    %335 = vmatprep.subr.mxu0 %v76
    %336 = vmatpush1.msra.mxu0 %v75
    %337 = vmatprep.subr.mxu0 %v84
    %338 = vmatpush1.msra.mxu0 %v83
    %339 = vmatprep.subr.mxu0 %v92
    %340 = vmatpush1.msra.mxu0 %v91
    %341 = vmatprep.subr.mxu0 %v100
    %342 = vmatpush1.msra.mxu0 %v99
    %343 = vmatprep.subr.mxu0 0.0
    %344 = vmatpush1.msra.mxu0 0.0
    %345 = vmatprep.subr.mxu0 0.0
    %346 = vmatpush1.msra.mxu0 0.0
    %347 = vmatprep.subr.mxu0 0.0
    %348 = vmatpush1.msra.mxu0 0.0
    %349 = vmatprep.subr.mxu0 0.0
    %350 = vmatpush1.msra.mxu0 0.0
    %351 = vmatprep.subr.mxu0 0.0
    %352 = vmatpush1.msra.mxu0 0.0
    %353 = vmatprep.subr.mxu0 0.0
    %354 = vmatpush1.msra.mxu0 0.0
    %355 = vmatprep.subr.mxu0 0.0
    %356 = vmatpush1.msra.mxu0 0.0
    %357 = vmatprep.subr.mxu0 0.0
    %358 = vmatpush1.msra.mxu0 0.0
    %359 = vmatprep.subr.mxu0 0.0
    %360 = vmatpush1.msra.mxu0 0.0
    %361 = vmatprep.subr.mxu0 0.0
    %362 = vmatpush1.msra.mxu0 0.0
    %363 = vmatprep.subr.mxu0 0.0
    %364 = vmatpush1.msra.mxu0 0.0
    %365 = vmatprep.subr.mxu0 0.0
    %366 = vmatpush1.msra.mxu0 0.0
    %367 = vmatprep.subr.mxu0 0.0
    %368 = vmatpush1.msra.mxu0 0.0
    %369 = vmatprep.subr.mxu0 0.0
    %370 = vmatpush1.msra.mxu0 0.0
    %371 = vmatprep.subr.mxu0 0.0
    %372 = vmatpush1.msra.mxu0 0.0
    %373 = vmatprep.subr.mxu0 0.0
    %374 = vmatpush1.msra.mxu0 0.0
    %375 = vmatprep.subr.mxu0 0.0
    %376 = vmatpush1.msra.mxu0 0.0
    %377 = vmatprep.subr.mxu0 0.0
    %378 = vmatpush1.msra.mxu0 0.0
    %379 = vmatprep.subr.mxu0 0.0
    %380 = vmatpush1.msra.mxu0 0.0
    %381 = vmatprep.subr.mxu0 0.0
    %382 = vmatpush1.msra.mxu0 0.0
    %383 = vmatprep.subr.mxu0 0.0
    %384 = vmatpush1.msra.mxu0 0.0
    %385 = vmatprep.subr.mxu0 0.0
    %386 = vmatpush1.msra.mxu0 0.0
    %387 = vmatprep.subr.mxu0 0.0
    %388 = vmatpush1.msra.mxu0 0.0
    %389 = vmatprep.subr.mxu0 0.0
    %390 = vmatpush1.msra.mxu0 0.0
    %391 = vmatprep.subr.mxu0 0.0
    %392 = vmatpush1.msra.mxu0 0.0
    %393 = vmatprep.subr.mxu0 0.0
    %394 = vmatpush1.msra.mxu0 0.0
    %395 = vmatprep.subr.mxu0 0.0
    %396 = vmatpush1.msra.mxu0 0.0
    %397 = vmatprep.subr.mxu0 0.0
    %398 = vmatpush1.msra.mxu0 0.0
    %399 = vmatprep.mubr.f32.mxu0 0.0
    %400 = vmatmul.mubr.f32.gmra.mrb[0].mxu0 %v120
    %v401 = vpop.f32.mrb[0].mxu0
    %v402 = vadd.f32 0.0, %v401
    %v403 = vpop.f32.mrb[0].mxu0
    %v404 = vadd.f32 0.0, %v403
    %405 = vdwg.mxu0
    %v406 = vld [vmem:[#allocation5] sm:$0xff]
    %vm407 = vcmask 130048
    %v409 = vsel %vm407, %v406, 0
    %411 = vmatprep.subr.mxu0 %v102
    %412 = vmatpush1.msra.mxu0 %v101
    %413 = vmatprep.subr.mxu0 %v110
    %414 = vmatpush1.msra.mxu0 %v109
    %415 = vmatprep.subr.mxu0 0.0
    %416 = vmatpush1.msra.mxu0 0.0
    %417 = vmatprep.subr.mxu0 0.0
    %418 = vmatpush1.msra.mxu0 0.0
    %419 = vmatprep.subr.mxu0 0.0
    %420 = vmatpush1.msra.mxu0 0.0
    %421 = vmatprep.subr.mxu0 0.0
    %422 = vmatpush1.msra.mxu0 0.0
    %423 = vmatprep.subr.mxu0 0.0
    %424 = vmatpush1.msra.mxu0 0.0
    %425 = vmatprep.subr.mxu0 0.0
    %426 = vmatpush1.msra.mxu0 0.0
    %427 = vmatprep.subr.mxu0 0.0
    %428 = vmatpush1.msra.mxu0 0.0
    %429 = vmatprep.subr.mxu0 0.0
    %430 = vmatpush1.msra.mxu0 0.0
    %431 = vmatprep.subr.mxu0 0.0
    %432 = vmatpush1.msra.mxu0 0.0
    %433 = vmatprep.subr.mxu0 0.0
    %434 = vmatpush1.msra.mxu0 0.0
    %435 = vmatprep.subr.mxu0 0.0
    %436 = vmatpush1.msra.mxu0 0.0
    %437 = vmatprep.subr.mxu0 0.0
    %438 = vmatpush1.msra.mxu0 0.0
    %439 = vmatprep.subr.mxu0 0.0
    %440 = vmatpush1.msra.mxu0 0.0
    %441 = vmatprep.subr.mxu0 0.0
    %442 = vmatpush1.msra.mxu0 0.0
    %443 = vmatprep.subr.mxu0 0.0
    %444 = vmatpush1.msra.mxu0 0.0
    %445 = vmatprep.subr.mxu0 0.0
    %446 = vmatpush1.msra.mxu0 0.0
    %447 = vmatprep.subr.mxu0 0.0
    %448 = vmatpush1.msra.mxu0 0.0
    %449 = vmatprep.subr.mxu0 0.0
    %450 = vmatpush1.msra.mxu0 0.0
    %451 = vmatprep.subr.mxu0 0.0
    %452 = vmatpush1.msra.mxu0 0.0
    %453 = vmatprep.subr.mxu0 0.0
    %454 = vmatpush1.msra.mxu0 0.0
    %455 = vmatprep.subr.mxu0 0.0
    %456 = vmatpush1.msra.mxu0 0.0
    %457 = vmatprep.subr.mxu0 0.0
    %458 = vmatpush1.msra.mxu0 0.0
    %459 = vmatprep.subr.mxu0 0.0
    %460 = vmatpush1.msra.mxu0 0.0
    %461 = vmatprep.subr.mxu0 0.0
    %462 = vmatpush1.msra.mxu0 0.0
    %463 = vmatprep.subr.mxu0 0.0
    %464 = vmatpush1.msra.mxu0 0.0
    %465 = vmatprep.subr.mxu0 0.0
    %466 = vmatpush1.msra.mxu0 0.0
    %467 = vmatprep.subr.mxu0 0.0
    %468 = vmatpush1.msra.mxu0 0.0
    %469 = vmatprep.subr.mxu0 0.0
    %470 = vmatpush1.msra.mxu0 0.0
    %471 = vmatprep.subr.mxu0 0.0
    %472 = vmatpush1.msra.mxu0 0.0
    %473 = vmatprep.subr.mxu0 0.0
    %474 = vmatpush1.msra.mxu0 0.0
    %475 = vmatprep.mubr.f32.mxu0 0.0
    %476 = vmatmul.mubr.f32.gmra.mrb[0].mxu0 %v409
    %v477 = vpop.f32.mrb[0].mxu0
    %v478 = vadd.f32 0.0, %v477
    %v479 = vpop.f32.mrb[0].mxu0
    %v480 = vadd.f32 0.0, %v479
    %481 = vdwg.mxu0
    %482 = vmatprep.subr.mxu0 %v104
    %483 = vmatpush1.msra.mxu0 %v103
    %484 = vmatprep.subr.mxu0 %v112
    %485 = vmatpush1.msra.mxu0 %v111
    %486 = vmatprep.subr.mxu0 0.0
    %487 = vmatpush1.msra.mxu0 0.0
    %488 = vmatprep.subr.mxu0 0.0
    %489 = vmatpush1.msra.mxu0 0.0
    %490 = vmatprep.subr.mxu0 0.0
    %491 = vmatpush1.msra.mxu0 0.0
    %492 = vmatprep.subr.mxu0 0.0
    %493 = vmatpush1.msra.mxu0 0.0
    %494 = vmatprep.subr.mxu0 0.0
    %495 = vmatpush1.msra.mxu0 0.0
    %496 = vmatprep.subr.mxu0 0.0
    %497 = vmatpush1.msra.mxu0 0.0
    %498 = vmatprep.subr.mxu0 0.0
    %499 = vmatpush1.msra.mxu0 0.0
    %500 = vmatprep.subr.mxu0 0.0
    %501 = vmatpush1.msra.mxu0 0.0
    %502 = vmatprep.subr.mxu0 0.0
    %503 = vmatpush1.msra.mxu0 0.0
    %504 = vmatprep.subr.mxu0 0.0
    %505 = vmatpush1.msra.mxu0 0.0
    %506 = vmatprep.subr.mxu0 0.0
    %507 = vmatpush1.msra.mxu0 0.0
    %508 = vmatprep.subr.mxu0 0.0
    %509 = vmatpush1.msra.mxu0 0.0
    %510 = vmatprep.subr.mxu0 0.0
    %511 = vmatpush1.msra.mxu0 0.0
    %512 = vmatprep.subr.mxu0 0.0
    %513 = vmatpush1.msra.mxu0 0.0
    %514 = vmatprep.subr.mxu0 0.0
    %515 = vmatpush1.msra.mxu0 0.0
    %516 = vmatprep.subr.mxu0 0.0
    %517 = vmatpush1.msra.mxu0 0.0
    %518 = vmatprep.subr.mxu0 0.0
    %519 = vmatpush1.msra.mxu0 0.0
    %520 = vmatprep.subr.mxu0 0.0
    %521 = vmatpush1.msra.mxu0 0.0
    %522 = vmatprep.subr.mxu0 0.0
    %523 = vmatpush1.msra.mxu0 0.0
    %524 = vmatprep.subr.mxu0 0.0
    %525 = vmatpush1.msra.mxu0 0.0
    %526 = vmatprep.subr.mxu0 0.0
    %527 = vmatpush1.msra.mxu0 0.0
    %528 = vmatprep.subr.mxu0 0.0
    %529 = vmatpush1.msra.mxu0 0.0
    %530 = vmatprep.subr.mxu0 0.0
    %531 = vmatpush1.msra.mxu0 0.0
    %532 = vmatprep.subr.mxu0 0.0
    %533 = vmatpush1.msra.mxu0 0.0
    %534 = vmatprep.subr.mxu0 0.0
    %535 = vmatpush1.msra.mxu0 0.0
    %536 = vmatprep.subr.mxu0 0.0
    %537 = vmatpush1.msra.mxu0 0.0
    %538 = vmatprep.subr.mxu0 0.0
    %539 = vmatpush1.msra.mxu0 0.0
    %540 = vmatprep.subr.mxu0 0.0
    %541 = vmatpush1.msra.mxu0 0.0
    %542 = vmatprep.subr.mxu0 0.0
    %543 = vmatpush1.msra.mxu0 0.0
    %544 = vmatprep.subr.mxu0 0.0
    %545 = vmatpush1.msra.mxu0 0.0
    %546 = vmatprep.mubr.f32.mxu0 0.0
    %547 = vmatmul.mubr.f32.gmra.mrb[0].mxu0 %v409
    %v548 = vpop.f32.mrb[0].mxu0
    %v549 = vadd.f32 0.0, %v548
    %v550 = vpop.f32.mrb[0].mxu0
    %v551 = vadd.f32 0.0, %v550
    %552 = vdwg.mxu0
    %553 = vmatprep.subr.mxu0 %v106
    %554 = vmatpush1.msra.mxu0 %v105
    %555 = vmatprep.subr.mxu0 %v114
    %556 = vmatpush1.msra.mxu0 %v113
    %557 = vmatprep.subr.mxu0 0.0
    %558 = vmatpush1.msra.mxu0 0.0
    %559 = vmatprep.subr.mxu0 0.0
    %560 = vmatpush1.msra.mxu0 0.0
    %561 = vmatprep.subr.mxu0 0.0
    %562 = vmatpush1.msra.mxu0 0.0
    %563 = vmatprep.subr.mxu0 0.0
    %564 = vmatpush1.msra.mxu0 0.0
    %565 = vmatprep.subr.mxu0 0.0
    %566 = vmatpush1.msra.mxu0 0.0
    %567 = vmatprep.subr.mxu0 0.0
    %568 = vmatpush1.msra.mxu0 0.0
    %569 = vmatprep.subr.mxu0 0.0
    %570 = vmatpush1.msra.mxu0 0.0
    %571 = vmatprep.subr.mxu0 0.0
    %572 = vmatpush1.msra.mxu0 0.0
    %573 = vmatprep.subr.mxu0 0.0
    %574 = vmatpush1.msra.mxu0 0.0
    %575 = vmatprep.subr.mxu0 0.0
    %576 = vmatpush1.msra.mxu0 0.0
    %577 = vmatprep.subr.mxu0 0.0
    %578 = vmatpush1.msra.mxu0 0.0
    %579 = vmatprep.subr.mxu0 0.0
    %580 = vmatpush1.msra.mxu0 0.0
    %581 = vmatprep.subr.mxu0 0.0
    %582 = vmatpush1.msra.mxu0 0.0
    %583 = vmatprep.subr.mxu0 0.0
    %584 = vmatpush1.msra.mxu0 0.0
    %585 = vmatprep.subr.mxu0 0.0
    %586 = vmatpush1.msra.mxu0 0.0
    %587 = vmatprep.subr.mxu0 0.0
    %588 = vmatpush1.msra.mxu0 0.0
    %589 = vmatprep.subr.mxu0 0.0
    %590 = vmatpush1.msra.mxu0 0.0
    %591 = vmatprep.subr.mxu0 0.0
    %592 = vmatpush1.msra.mxu0 0.0
    %593 = vmatprep.subr.mxu0 0.0
    %594 = vmatpush1.msra.mxu0 0.0
    %595 = vmatprep.subr.mxu0 0.0
    %596 = vmatpush1.msra.mxu0 0.0
    %597 = vmatprep.subr.mxu0 0.0
    %598 = vmatpush1.msra.mxu0 0.0
    %599 = vmatprep.subr.mxu0 0.0
    %600 = vmatpush1.msra.mxu0 0.0
    %601 = vmatprep.subr.mxu0 0.0
    %602 = vmatpush1.msra.mxu0 0.0
    %603 = vmatprep.subr.mxu0 0.0
    %604 = vmatpush1.msra.mxu0 0.0
    %605 = vmatprep.subr.mxu0 0.0
    %606 = vmatpush1.msra.mxu0 0.0
    %607 = vmatprep.subr.mxu0 0.0
    %608 = vmatpush1.msra.mxu0 0.0
    %609 = vmatprep.subr.mxu0 0.0
    %610 = vmatpush1.msra.mxu0 0.0
    %611 = vmatprep.subr.mxu0 0.0
    %612 = vmatpush1.msra.mxu0 0.0
    %613 = vmatprep.subr.mxu0 0.0
    %614 = vmatpush1.msra.mxu0 0.0
    %615 = vmatprep.subr.mxu0 0.0
    %616 = vmatpush1.msra.mxu0 0.0
    %617 = vmatprep.mubr.f32.mxu0 0.0
    %618 = vmatmul.mubr.f32.gmra.mrb[0].mxu0 %v409
    %v619 = vpop.f32.mrb[0].mxu0
    %v620 = vadd.f32 0.0, %v619
    %v621 = vpop.f32.mrb[0].mxu0
    %v622 = vadd.f32 0.0, %v621
    %623 = vdwg.mxu0
    %624 = vmatprep.subr.mxu0 %v108
    %625 = vmatpush1.msra.mxu0 %v107
    %626 = vmatprep.subr.mxu0 %v116
    %627 = vmatpush1.msra.mxu0 %v115
    %628 = vmatprep.subr.mxu0 0.0
    %629 = vmatpush1.msra.mxu0 0.0
    %630 = vmatprep.subr.mxu0 0.0
    %631 = vmatpush1.msra.mxu0 0.0
    %632 = vmatprep.subr.mxu0 0.0
    %633 = vmatpush1.msra.mxu0 0.0
    %634 = vmatprep.subr.mxu0 0.0
    %635 = vmatpush1.msra.mxu0 0.0
    %636 = vmatprep.subr.mxu0 0.0
    %637 = vmatpush1.msra.mxu0 0.0
    %638 = vmatprep.subr.mxu0 0.0
    %639 = vmatpush1.msra.mxu0 0.0
    %640 = vmatprep.subr.mxu0 0.0
    %641 = vmatpush1.msra.mxu0 0.0
    %642 = vmatprep.subr.mxu0 0.0
    %643 = vmatpush1.msra.mxu0 0.0
    %644 = vmatprep.subr.mxu0 0.0
    %645 = vmatpush1.msra.mxu0 0.0
    %646 = vmatprep.subr.mxu0 0.0
    %647 = vmatpush1.msra.mxu0 0.0
    %648 = vmatprep.subr.mxu0 0.0
    %649 = vmatpush1.msra.mxu0 0.0
    %650 = vmatprep.subr.mxu0 0.0
    %651 = vmatpush1.msra.mxu0 0.0
    %652 = vmatprep.subr.mxu0 0.0
    %653 = vmatpush1.msra.mxu0 0.0
    %654 = vmatprep.subr.mxu0 0.0
    %655 = vmatpush1.msra.mxu0 0.0
    %656 = vmatprep.subr.mxu0 0.0
    %657 = vmatpush1.msra.mxu0 0.0
    %658 = vmatprep.subr.mxu0 0.0
    %659 = vmatpush1.msra.mxu0 0.0
    %660 = vmatprep.subr.mxu0 0.0
    %661 = vmatpush1.msra.mxu0 0.0
    %662 = vmatprep.subr.mxu0 0.0
    %663 = vmatpush1.msra.mxu0 0.0
    %664 = vmatprep.subr.mxu0 0.0
    %665 = vmatpush1.msra.mxu0 0.0
    %666 = vmatprep.subr.mxu0 0.0
    %667 = vmatpush1.msra.mxu0 0.0
    %668 = vmatprep.subr.mxu0 0.0
    %669 = vmatpush1.msra.mxu0 0.0
    %670 = vmatprep.subr.mxu0 0.0
    %671 = vmatpush1.msra.mxu0 0.0
    %672 = vmatprep.subr.mxu0 0.0
    %673 = vmatpush1.msra.mxu0 0.0
    %674 = vmatprep.subr.mxu0 0.0
    %675 = vmatpush1.msra.mxu0 0.0
    %676 = vmatprep.subr.mxu0 0.0
    %677 = vmatpush1.msra.mxu0 0.0
    %678 = vmatprep.subr.mxu0 0.0
    %679 = vmatpush1.msra.mxu0 0.0
    %680 = vmatprep.subr.mxu0 0.0
    %681 = vmatpush1.msra.mxu0 0.0
    %682 = vmatprep.subr.mxu0 0.0
    %683 = vmatpush1.msra.mxu0 0.0
    %684 = vmatprep.subr.mxu0 0.0
    %685 = vmatpush1.msra.mxu0 0.0
    %686 = vmatprep.subr.mxu0 0.0
    %687 = vmatpush1.msra.mxu0 0.0
    %688 = vmatprep.mubr.f32.mxu0 0.0
    %689 = vmatmul.mubr.f32.gmra.mrb[0].mxu0 %v409
    %v690 = vpop.f32.mrb[0].mxu0
    %v691 = vadd.f32 0.0, %v690
    %v692 = vpop.f32.mrb[0].mxu0
    %v693 = vadd.f32 0.0, %v692
    %694 = vdwg.mxu0
    %v695 = vmul.f32 %v189, %v478
    %v696 = vmul.f32 %v191, %v480
    %v697 = vmul.f32 %v260, %v549
    %v698 = vmul.f32 %v262, %v551
    %v699 = vmul.f32 %v331, %v620
    %v700 = vmul.f32 %v333, %v622
    %v701 = vmul.f32 %v402, %v691
    %v702 = vmul.f32 %v404, %v693
    %v703 = vmul.f32 %v695, 0.03125
    %v704 = vmul.f32 %v696, 0.03125
    %v705 = vmul.f32 %v697, 0.03125
    %v706 = vmul.f32 %v698, 0.03125
    %v707 = vmul.f32 %v699, 0.03125
    %v708 = vmul.f32 %v700, 0.03125
    %v709 = vmul.f32 %v701, 0.03125
    %v710 = vmul.f32 %v702, 0.03125
    %711 = vst [vmem:[#allocation10] sm:$0xff] %v703
    %712 = vst [vmem:[#allocation10 + $0x8] sm:$0xff] %v704
    %713 = vst [vmem:[#allocation10 + $0x10] sm:$0xff] %v705
    %714 = vst [vmem:[#allocation10 + $0x18] sm:$0xff] %v706
    %715 = vst [vmem:[#allocation10 + $0x20] sm:$0xff] %v707
    %716 = vst [vmem:[#allocation10 + $0x28] sm:$0xff] %v708
    %717 = vst [vmem:[#allocation10 + $0x30] sm:$0xff] %v709
    %718 = vst [vmem:[#allocation10 + $0x38] sm:$0xff] %v710
    // Predicated region
    $region34: #{tpu_custom_call.1} parent=1 // pred_check
      _
    $region35: #{tpu_custom_call.1} parent=1 // pred_check_branch
      %720 = sbr.rel (0) target = $region37
    $region36: #{tpu_custom_call.1} parent=1 // pred_region
      %s722 = ssub.s32 1024, 1024
      %723 = vsyncadd [#allocation4], %s722
      %s725 = sshll.u32 [#allocation10], 4
      %s726 = int_to_ptr.vmem [resolvable:$true] %s725
      %728 = dma.vmem_to_hbm [thread:$0]  %s726, 1024, %s4, [#allocation4]
    $region37: #{tpu_custom_call.1} parent=1 // pred_fallthru
      _
    // Predicated region
    $region38: #{tpu_custom_call.1} parent=1 // pred_check
      _
    $region39: #{tpu_custom_call.1} parent=1 // pred_check_branch
      %730 = sbr.rel (0) target = $region41
    $region40: #{tpu_custom_call.1} parent=1 // pred_region
      %731 = dma.done [#allocation4], 1024
    $region41: #{tpu_custom_call.1} parent=1 // pred_fallthru
      _
    %732 = vsyncpa [#allocation3], 1
    %733 = vsyncpa [#allocation6], 1
    %734 = vsyncpa [#allocation9], 1
    %735 = vsyncpa [#allocation4], 1

</llo_original>
